<compile_context>
chip_gen: v6e
topology: v6e:2x2x1
jax: 0.10.0
libtpu: 0.0.40
codegen_flags: <defaults>
</compile_context>

<pallas_src>
import functools

import jax
import jax.numpy as jnp
from jax.experimental import pallas as pl
from jax.experimental.pallas import tpu as pltpu

_MiB = 1024 * 1024
_F32_TEMPS = 3                 # live (tb, dim) f32 temporaries inside the fast-path kernel
_TILE_BYTE_CAP = 8 * _MiB      # per-input-tile cap: HBM-bound, bigger tiles add no roofline


# ---------------------------------------------------------------------------
# Fast path kernel: full feature dim resident per block, one HBM pass.
# ---------------------------------------------------------------------------
def _layernorm_rows_kernel(x_ref, w_ref, b_ref, o_ref, *, eps):
    x = x_ref[...].astype(jnp.float32)                        # (tb, dim)
    mean = jnp.mean(x, axis=-1, keepdims=True)                # (tb, 1)
    centered = x - mean
    var = jnp.mean(centered * centered, axis=-1, keepdims=True) + eps
    inv_std = jax.lax.rsqrt(var)                              # EUP rsqrt
    w = w_ref[...].astype(jnp.float32)                        # (1, dim)
    b = b_ref[...].astype(jnp.float32)                        # (1, dim)
    o_ref[...] = (w * (centered * inv_std) + b).astype(o_ref.dtype)


# ---------------------------------------------------------------------------
# Column-tiled fallback (very large dim): three pallas_calls matching the
# Triton module (mean -> variance of centered values -> normalize).
# ---------------------------------------------------------------------------
def _mean_kernel(x_ref, mean_ref, sum_ref, *, dim, col_block):
    j = pl.program_id(1)

    @pl.when(j == 0)
    def _():
        sum_ref[...] = jnp.zeros_like(sum_ref)

    x = x_ref[...].astype(jnp.float32)                        # (tb, tc)
    if dim % col_block != 0:
        # Mask out-of-range feature columns of the last (partial) column tile.
        col = j * col_block + jax.lax.broadcasted_iota(jnp.int32, x.shape, 1)
        x = jnp.where(col < dim, x, 0.0)
    sum_ref[...] += jnp.sum(x, axis=-1, keepdims=True)

    @pl.when(j == pl.num_programs(1) - 1)
    def _():
        mean_ref[...] = sum_ref[...] * (1.0 / dim)


def _var_kernel(x_ref, mean_ref, rstd_ref, acc_ref, *, dim, eps, col_block):
    j = pl.program_id(1)

    @pl.when(j == 0)
    def _():
        acc_ref[...] = jnp.zeros_like(acc_ref)

    c = x_ref[...].astype(jnp.float32) - mean_ref[...]        # centered (no cancellation)
    if dim % col_block != 0:
        col = j * col_block + jax.lax.broadcasted_iota(jnp.int32, c.shape, 1)
        c = jnp.where(col < dim, c, 0.0)
    acc_ref[...] += jnp.sum(c * c, axis=-1, keepdims=True)

    @pl.when(j == pl.num_programs(1) - 1)
    def _():
        rstd_ref[...] = jax.lax.rsqrt(acc_ref[...] * (1.0 / dim) + eps)


def _normalize_kernel(x_ref, mean_ref, rstd_ref, w_ref, b_ref, o_ref):
    x = x_ref[...].astype(jnp.float32)                        # (tb, tc)
    w = w_ref[...].astype(jnp.float32)                        # (1, tc)
    b = b_ref[...].astype(jnp.float32)                        # (1, tc)
    y = w * ((x - mean_ref[...]) * rstd_ref[...]) + b
    o_ref[...] = y.astype(o_ref.dtype)


# ---------------------------------------------------------------------------
# Tiling helpers.
# ---------------------------------------------------------------------------
def _sublane_pack(dtype):
    # Rows per packed sublane group: 8 (32-bit), 16 (bf16/f16), 32 (8-bit).
    return max(8, 32 // jnp.dtype(dtype).itemsize)


def _round_down(x, m):
    return (x // m) * m


def _round_up(x, m):
    return ((x + m - 1) // m) * m


def _vmem_capacity_bytes():
    cap = 64 * _MiB          # conservative default (v7x per-core)
    try:
        info = pltpu.get_tpu_info()
        cap = int(getattr(info, "vmem_capacity_bytes", cap))
    except Exception:
        pass
    return cap


def _per_row_bytes(dim, itemsize, out_itemsize):
    # x tile double-buffered + out tile double-buffered + live f32 temporaries.
    return dim * (2 * itemsize + 2 * out_itemsize + _F32_TEMPS * 4)


def _choose_row_tile(batch, dim, itemsize, out_itemsize, pack, budget_bytes):
    """Fast-path row tile: fit VMEM budget + byte cap, keep the grid deep."""
    if batch <= pack:
        return batch
    per_row = _per_row_bytes(dim, itemsize, out_itemsize)
    wb = 2 * 2 * dim * 4                                       # weight + bias, double-buffered
    avail = max(budget_bytes - wb, per_row)
    tb = _round_down(avail // per_row, pack)
    tb = min(tb, _round_down(_TILE_BYTE_CAP // max(dim * itemsize, 1), pack))
    tb = min(max(tb, pack), _round_down(batch, pack))
    tb = max(tb, pack)
    # Grid depth: >= 8 steps when the tile stays >= ~64 rows, else >= 2 steps,
    # so the pipeline overlaps DMA/compute and v7x can split across both cores.
    floor_rows = max(pack, 64)
    deep = _round_down(batch // 8, pack)
    if deep >= floor_rows:
        tb = min(tb, deep)
    else:
        tb = min(tb, max(pack, _round_up(pl.cdiv(batch, 2), pack)))
    # Best-effort: even number of grid steps (balanced v7x megacore split).
    steps = pl.cdiv(batch, tb)
    if steps > 1 and steps % 2 == 1:
        tb_even = max(pack, _round_up(pl.cdiv(batch, steps + 1), pack))
        if tb_even <= tb and pl.cdiv(batch, tb_even) % 2 == 0:
            tb = tb_even
    return tb


# ---------------------------------------------------------------------------
# Public wrapper.
# ---------------------------------------------------------------------------
def triton_layer_norm(x, weight, bias, eps=1e-5, *,
                      vmem_budget_bytes=None, col_block=None):
    """y = weight * (x - mean) / sqrt(var_biased + eps) + bias over the last dim."""
    batch, dim = x.shape
    assert weight.shape == (dim,) and bias.shape == (dim,)

    cap = _vmem_capacity_bytes()
    # Tile-sizing budget: ~half of per-core VMEM (32 MiB v7x, 64 MiB v5e/v6e).
    budget = int(vmem_budget_bytes) if vmem_budget_bytes else cap // 2

    itemsize = jnp.dtype(x.dtype).itemsize
    out_itemsize = itemsize
    pack = _sublane_pack(x.dtype)

    w2 = weight.reshape(1, dim)
    b2 = bias.reshape(1, dim)

    per_row = _per_row_bytes(dim, itemsize, out_itemsize)
    wb_bytes = 2 * 2 * dim * 4
    avail = max(budget - wb_bytes, 0)
    rows_fit = avail // max(per_row, 1)
    use_fast = (rows_fit >= batch) if batch <= pack else (rows_fit >= pack)

    if use_fast:
        # ---------------- fast path ----------------
        tb = _choose_row_tile(batch, dim, itemsize, out_itemsize, pack, budget)
        grid = (pl.cdiv(batch, tb),)
        footprint = tb * per_row + wb_bytes
        vmem_limit = int(min(cap, max(footprint * 5 // 4, 32 * _MiB)))
        cost = pl.CostEstimate(
            flops=8 * batch * dim,
            transcendentals=batch,
            bytes_accessed=batch * dim * (itemsize + out_itemsize) + 2 * dim * 4,
        )
        kernel = functools.partial(_layernorm_rows_kernel, eps=eps)
        return pl.pallas_call(
            kernel,
            out_shape=jax.ShapeDtypeStruct((batch, dim), x.dtype),
            grid_spec=pltpu.PrefetchScalarGridSpec(
                num_scalar_prefetch=0,
                grid=grid,
                in_specs=[
                    pl.BlockSpec((tb, dim), lambda i: (i, 0)),
                    pl.BlockSpec((1, dim), lambda i: (0, 0)),
                    pl.BlockSpec((1, dim), lambda i: (0, 0)),
                ],
                out_specs=pl.BlockSpec((tb, dim), lambda i: (i, 0)),
            ),
            compiler_params=pltpu.CompilerParams(
                dimension_semantics=("parallel",),
                vmem_limit_bytes=vmem_limit,
            ),
            cost_estimate=cost,
        )(x, w2, b2)

    # ---------------- column-tiled fallback (very large dim) ----------------
    if dim <= 128:
        tc = dim
    else:
        tc = int(col_block) if col_block else min(2048, _round_down(dim, 128))

    per_row_fb = _per_row_bytes(tc, itemsize, out_itemsize)
    wb_fb = 2 * 2 * tc * 4
    avail_fb = max(budget - wb_fb, per_row_fb)
    tb = _round_down(avail_fb // per_row_fb, pack)
    tb = max(pack, min(tb, 512))
    if batch <= pack:
        tb = batch
    else:
        tb = min(tb, _round_down(batch, pack))

    rows = pl.cdiv(batch, tb)
    cols = pl.cdiv(dim, tc)
    footprint_fb = tb * per_row_fb + wb_fb + 8 * tb * 4
    vmem_limit = int(min(cap, max(footprint_fb * 5 // 4, 32 * _MiB)))
    cparams_reduce = pltpu.CompilerParams(
        dimension_semantics=("parallel", "arbitrary"),
        vmem_limit_bytes=vmem_limit,
    )

    mean = pl.pallas_call(
        functools.partial(_mean_kernel, dim=dim, col_block=tc),
        out_shape=jax.ShapeDtypeStruct((batch, 1), jnp.float32),
        grid_spec=pltpu.PrefetchScalarGridSpec(
            num_scalar_prefetch=0,
            grid=(rows, cols),
            in_specs=[pl.BlockSpec((tb, tc), lambda i, j: (i, j))],
            out_specs=pl.BlockSpec((tb, 1), lambda i, j: (i, 0)),
            scratch_shapes=[pltpu.VMEM((tb, 1), jnp.float32)],
        ),
        compiler_params=cparams_reduce,
    )(x)

    rstd = pl.pallas_call(
        functools.partial(_var_kernel, dim=dim, eps=eps, col_block=tc),
        out_shape=jax.ShapeDtypeStruct((batch, 1), jnp.float32),
        grid_spec=pltpu.PrefetchScalarGridSpec(
            num_scalar_prefetch=0,
            grid=(rows, cols),
            in_specs=[pl.BlockSpec((tb, tc), lambda i, j: (i, j)),
                      pl.BlockSpec((tb, 1), lambda i, j: (i, 0))],
            out_specs=pl.BlockSpec((tb, 1), lambda i, j: (i, 0)),
            scratch_shapes=[pltpu.VMEM((tb, 1), jnp.float32)],
        ),
        compiler_params=cparams_reduce,
    )(x, mean)

    return pl.pallas_call(
        _normalize_kernel,
        out_shape=jax.ShapeDtypeStruct((batch, dim), x.dtype),
        grid_spec=pltpu.PrefetchScalarGridSpec(
            num_scalar_prefetch=0,
            grid=(rows, cols),
            in_specs=[
                pl.BlockSpec((tb, tc), lambda i, j: (i, j)),
                pl.BlockSpec((tb, 1), lambda i, j: (i, 0)),
                pl.BlockSpec((tb, 1), lambda i, j: (i, 0)),
                pl.BlockSpec((1, tc), lambda i, j: (0, j)),
                pl.BlockSpec((1, tc), lambda i, j: (0, j)),
            ],
            out_specs=pl.BlockSpec((tb, tc), lambda i, j: (i, j)),
        ),
        compiler_params=pltpu.CompilerParams(
            dimension_semantics=("parallel", "parallel"),
            vmem_limit_bytes=vmem_limit,
        ),
    )(x, mean, rstd, w2, b2)


if __name__ == "__main__":
    key = jax.random.PRNGKey(0)
    k1, k2, k3 = jax.random.split(key, 3)

    def ref_layernorm(x, w, b, eps=1e-5):
        xf = x.astype(jnp.float32)
        mean = jnp.mean(xf, axis=-1, keepdims=True)
        var = jnp.mean((xf - mean) ** 2, axis=-1, keepdims=True) + eps
        y = w.astype(jnp.float32) * ((xf - mean) / jnp.sqrt(var)) + b.astype(jnp.float32)
        return y.astype(x.dtype)

    # 1) Fast path, small shape matching the original module test (batch=8, dim=32).
    batch, dim = 8, 32
    x = jax.random.normal(k1, (batch, dim), dtype=jnp.float32)
    weight = jnp.ones((dim,), dtype=jnp.float32)
    bias = jnp.zeros((dim,), dtype=jnp.float32)
    out = triton_layer_norm(x, weight, bias, eps=1e-5)
    jax.block_until_ready(out)
    assert jnp.allclose(out, ref_layernorm(x, weight, bias), atol=1e-5, rtol=1e-5)

    # 2) Fast path with a multi-step (even) grid: batch=256, dim=128.
    batch3, dim3 = 256, 128
    x3 = jax.random.normal(k3, (batch3, dim3), dtype=jnp.float32) * 2.0 + 0.5
    weight3 = jnp.linspace(0.5, 1.5, dim3, dtype=jnp.float32)
    bias3 = jnp.linspace(-0.25, 0.25, dim3, dtype=jnp.float32)
    out3 = triton_layer_norm(x3, weight3, bias3, eps=1e-5)
    jax.block_until_ready(out3)
    assert jnp.allclose(out3, ref_layernorm(x3, weight3, bias3), atol=1e-4, rtol=1e-4)

    # 3) Column-tiled fallback path, forced via a tiny VMEM tile budget.
    batch2, dim2 = 16, 320
    x2 = jax.random.normal(k2, (batch2, dim2), dtype=jnp.float32) + 3.0
    weight2 = jnp.linspace(0.5, 1.5, dim2, dtype=jnp.float32)
    bias2 = jnp.linspace(-0.25, 0.25, dim2, dtype=jnp.float32)
    out2 = triton_layer_norm(x2, weight2, bias2, eps=1e-5,
                             vmem_budget_bytes=64 * 1024, col_block=128)
    jax.block_until_ready(out2)
    assert jnp.allclose(out2, ref_layernorm(x2, weight2, bias2), atol=1e-4, rtol=1e-4)

    print("KERNEL_OK")
</pallas_src>

<mosaic_0001>
module attributes {stable_mosaic.version = 11 : i64} {
  func.func @_layernorm_rows_kernel(%arg0: i32, %arg1: memref<8x32xf32, #tpu.memory_space<vmem>>, %arg2: memref<1x32xf32, #tpu.memory_space<vmem>>, %arg3: memref<1x32xf32, #tpu.memory_space<vmem>>, %arg4: memref<8x32xf32, #tpu.memory_space<vmem>>) attributes {dimension_semantics = [#tpu.dimension_semantics<parallel>], iteration_bounds = array<i64: 1>, scalar_prefetch = 0 : i64, scratch_operands = 0 : i64, tpu.core_type = #tpu.core_type<tc>, window_params = [{transform_indices = @transform_0, window_bounds = array<i64: 8, 32>}, {pipeline_mode = #tpu.pipeline_mode<synchronous>, transform_indices = @transform_1, window_bounds = array<i64: 1, 32>}, {pipeline_mode = #tpu.pipeline_mode<synchronous>, transform_indices = @transform_2, window_bounds = array<i64: 1, 32>}, {transform_indices = @transform_3, window_bounds = array<i64: 8, 32>}]} {
    %c0 = arith.constant 0 : index
    %c0_0 = arith.constant 0 : index
    %0 = vector.load %arg1[%c0, %c0_0] : memref<8x32xf32, #tpu.memory_space<vmem>>, vector<8x32xf32>
    %cst = arith.constant dense<0.000000e+00> : vector<8xf32>
    %1 = vector.multi_reduction <add>, %0, %cst [1] : vector<8x32xf32> to vector<8xf32>
    %2 = vector.shape_cast %1 : vector<8xf32> to vector<8x1xf32>
    %cst_1 = arith.constant 3.200000e+01 : f32
    %3 = vector.broadcast %cst_1 : f32 to vector<8x1xf32>
    %4 = arith.divf %2, %3 : vector<8x1xf32>
    %5 = vector.broadcast %4 : vector<8x1xf32> to vector<8x32xf32>
    %6 = arith.subf %0, %5 : vector<8x32xf32>
    %7 = arith.mulf %6, %6 : vector<8x32xf32>
    %cst_2 = arith.constant dense<0.000000e+00> : vector<8xf32>
    %8 = vector.multi_reduction <add>, %7, %cst_2 [1] : vector<8x32xf32> to vector<8xf32>
    %9 = vector.shape_cast %8 : vector<8xf32> to vector<8x1xf32>
    %cst_3 = arith.constant 3.200000e+01 : f32
    %10 = vector.broadcast %cst_3 : f32 to vector<8x1xf32>
    %11 = arith.divf %9, %10 : vector<8x1xf32>
    %cst_4 = arith.constant 9.99999974E-6 : f32
    %12 = vector.broadcast %cst_4 : f32 to vector<8x1xf32>
    %13 = arith.addf %11, %12 : vector<8x1xf32>
    %14 = math.rsqrt %13 : vector<8x1xf32>
    %c0_5 = arith.constant 0 : index
    %c0_6 = arith.constant 0 : index
    %15 = vector.load %arg2[%c0_5, %c0_6] : memref<1x32xf32, #tpu.memory_space<vmem>>, vector<1x32xf32>
    %c0_7 = arith.constant 0 : index
    %c0_8 = arith.constant 0 : index
    %16 = vector.load %arg3[%c0_7, %c0_8] : memref<1x32xf32, #tpu.memory_space<vmem>>, vector<1x32xf32>
    %17 = vector.broadcast %14 : vector<8x1xf32> to vector<8x32xf32>
    %18 = arith.mulf %6, %17 : vector<8x32xf32>
    %19 = vector.broadcast %15 : vector<1x32xf32> to vector<8x32xf32>
    %20 = arith.mulf %19, %18 : vector<8x32xf32>
    %21 = vector.broadcast %16 : vector<1x32xf32> to vector<8x32xf32>
    %22 = arith.addf %20, %21 : vector<8x32xf32>
    %c0_9 = arith.constant 0 : index
    %c0_10 = arith.constant 0 : index
    %23 = vector.load %arg4[%c0_9, %c0_10] : memref<8x32xf32, #tpu.memory_space<vmem>>, vector<8x32xf32>
    tpu.vector_store %arg4[%c0_9, %c0_10], %22 {strides = array<i32>} : memref<8x32xf32, #tpu.memory_space<vmem>>, vector<8x32xf32>,
    return
  }
  func.func @transform_0(%arg0: i32) -> (i32, i32) {
    %c0_i32 = arith.constant 0 : i32
    %c0_i32_0 = arith.constant 0 : i32
    return %arg0, %c0_i32 : i32, i32
  }
  func.func @transform_1(%arg0: i32) -> (i32, i32) {
    %c0_i32 = arith.constant 0 : i32
    %c0_i32_0 = arith.constant 0 : i32
    %c0_i32_1 = arith.constant 0 : i32
    return %c0_i32, %c0_i32_0 : i32, i32
  }
  func.func @transform_2(%arg0: i32) -> (i32, i32) {
    %c0_i32 = arith.constant 0 : i32
    %c0_i32_0 = arith.constant 0 : i32
    %c0_i32_1 = arith.constant 0 : i32
    return %c0_i32, %c0_i32_0 : i32, i32
  }
  func.func @transform_3(%arg0: i32) -> (i32, i32) {
    %c0_i32 = arith.constant 0 : i32
    %c0_i32_0 = arith.constant 0 : i32
    return %arg0, %c0_i32 : i32, i32
  }
}

</mosaic_0001>

<llo_original>
// kernel: tpu_custom_call.1
$region0: #{tpu_custom_call.1}
  #allocation0 [shape = 'u32[]', space=smem, size = 0x4, offset = 0x4, fixed_abs, tag = 'smem constant byte address 0x4 - core index']
  #allocation1 [shape = 'u32[144,128]{1,0:T(1,128)}', space=vmem, size = 0x12000, scoped, tag = 'internal scratch']
  %s0 = inlined_call_operand.hbm [shape: f32[8,32], index: 0, kind: input, shape index: {}]
  %s1 = inlined_call_operand.vmem [shape: f32[1,32], index: 1, kind: input, shape index: {}]
  %s2 = inlined_call_operand.vmem [shape: f32[1,32], index: 2, kind: input, shape index: {}]
  %s3 = inlined_call_operand.hbm [shape: f32[8,32], index: 3, kind: output, shape index: {}]
  %s4 = sld [smem:[#allocation0]]
  $region26: #{tpu_custom_call.1} parent=0
    _
  %s6 = ssub.s32 1, %s4
  %s7 = scalar_select 0, %s6, %s4
  $region1: #{tpu_custom_call.1} parent=0
    #allocation2 [shape = 'u8[4096]{0}', space=vmem, size = 0x1000, scoped, tag = 'input window, operand 0, single buffered']
    #allocation3 [shape = 's32[1]{0}', space=sflag, size = 0x4, scoped, tag = 'scoped memory for tpu_custom_call.1']
    #allocation4 [shape = 's32[1]{0}', space=sflag, size = 0x4, scoped, tag = 'scoped memory for tpu_custom_call.1']
    #allocation5 [shape = 'u8[4096]{0}', space=vmem, size = 0x1000, scoped, tag = 'output window, operand 0, single buffered']
    %8 = vsyncpa [#allocation3], 0
    %9 = vsyncpa [#allocation4], 0
    // Predicated region
    $region2: #{tpu_custom_call.1} parent=1 // pred_check
      _
    $region3: #{tpu_custom_call.1} parent=1 // pred_check_branch
      %11 = sbr.rel (0) target = $region5
    $region4: #{tpu_custom_call.1} parent=1 // pred_region
      %s13 = ssub.s32 128, 128
      %14 = vsyncadd [#allocation3], %s13
      %s16 = sshll.u32 [#allocation2], 4
      %s17 = int_to_ptr.vmem [resolvable:$true] %s16
      %19 = dma.hbm_to_vmem [thread:$0]  %s0, 128, %s17, [#allocation3]
    $region5: #{tpu_custom_call.1} parent=1 // pred_fallthru
      _
    // Predicated region
    $region6: #{tpu_custom_call.1} parent=1 // pred_check
      _
    $region7: #{tpu_custom_call.1} parent=1 // pred_check_branch
      %21 = sbr.rel (0) target = $region9
    $region8: #{tpu_custom_call.1} parent=1 // pred_region
      _
    $region9: #{tpu_custom_call.1} parent=1 // pred_fallthru
      _
    // Predicated region
    $region10: #{tpu_custom_call.1} parent=1 // pred_check
      _
    $region11: #{tpu_custom_call.1} parent=1 // pred_check_branch
      %23 = sbr.rel (0) target = $region13
    $region12: #{tpu_custom_call.1} parent=1 // pred_region
      _
    $region13: #{tpu_custom_call.1} parent=1 // pred_fallthru
      _
    // Predicated region
    $region14: #{tpu_custom_call.1} parent=1 // pred_check
      _
    $region15: #{tpu_custom_call.1} parent=1 // pred_check_branch
      %25 = sbr.rel (0) target = $region17
    $region16: #{tpu_custom_call.1} parent=1 // pred_region
      %26 = dma.done [#allocation3], 128
    $region17: #{tpu_custom_call.1} parent=1 // pred_fallthru
      _
    %v27 = vld [vmem:[#allocation2] sm:$0xff]
    %vm28 = vcmask 261120
    %v29 = vsel %vm28, %v27, 0.0
    %30 = vadd.xlane.f32.xlu0 %v29
    %v31 = vpop.xlane.xlu0 %30
    %v32 = vrcp.pop 32.0
    %v33 = vmul.f32 %v31, %v32
    %v34 = vsub.f32 %v27, %v33
    %v35 = vmul.f32 %v34, %v34
    %v36 = vsel %vm28, %v35, 0.0
    %37 = vadd.xlane.f32.xlu0 %v36
    %v38 = vpop.xlane.xlu0 %37
    %v39 = vmul.f32 %v38, %v32
    %v40 = vadd.f32 %v39, 1e-05
    %v41 = vrsqrt.pop %v40
    %v42 = vld [vmem:[%s1] sm:$0x1]
    %v43 = vld [vmem:[%s2] sm:$0x1]
    %v44 = vmul.f32 %v34, %v41
    %v46 = vlaneseq
    %v47 = vshrl.u32 %v46, 7
    %v48 = vsub.s32 0, %v47
    %v49 = vrot.slane %v42, %v48
    %v51 = vmul.f32 %v49, %v44
    %v53 = vlaneseq
    %v54 = vshrl.u32 %v53, 7
    %v55 = vsub.s32 0, %v54
    %v56 = vrot.slane %v43, %v55
    %v58 = vadd.f32 %v51, %v56
    %59 = vst.msk [vmem:[#allocation5] sm:$0xff] %vm28, %v58
    // Predicated region
    $region18: #{tpu_custom_call.1} parent=1 // pred_check
      _
    $region19: #{tpu_custom_call.1} parent=1 // pred_check_branch
      %61 = sbr.rel (0) target = $region21
    $region20: #{tpu_custom_call.1} parent=1 // pred_region
      %s63 = ssub.s32 128, 128
      %64 = vsyncadd [#allocation4], %s63
      %s66 = sshll.u32 [#allocation5], 4
      %s67 = int_to_ptr.vmem [resolvable:$true] %s66
      %69 = dma.vmem_to_hbm [thread:$0]  %s67, 128, %s3, [#allocation4]
    $region21: #{tpu_custom_call.1} parent=1 // pred_fallthru
      _
    // Predicated region
    $region22: #{tpu_custom_call.1} parent=1 // pred_check
      _
    $region23: #{tpu_custom_call.1} parent=1 // pred_check_branch
      %71 = sbr.rel (0) target = $region25
    $region24: #{tpu_custom_call.1} parent=1 // pred_region
      %72 = dma.done [#allocation4], 128
    $region25: #{tpu_custom_call.1} parent=1 // pred_fallthru
      _
    %73 = vsyncpa [#allocation3], 1
    %74 = vsyncpa [#allocation4], 1

</llo_original>
